<compile_context>
chip_gen: v7x
topology: tpu7x:2x2x1
jax: 0.10.0
libtpu: 0.0.40
codegen_flags: <defaults>
</compile_context>

<pallas_src>
import jax
import jax.numpy as jnp
from jax.experimental import pallas as pl
from jax.experimental.pallas import tpu as pltpu


# --------------------------------------------------------------------------
# Fused patch-embedding kernel: im2col'd patches @ weight + bias
# --------------------------------------------------------------------------
def _patch_matmul_kernel(x_ref, w_ref, b_ref, o_ref):
    # x_ref: (tile_m, K)   w_ref: (K, tile_n)   b_ref: (1, tile_n)
    o_ref[...] = (
        jnp.dot(x_ref[...], w_ref[...], preferred_element_type=jnp.float32)
        + b_ref[...]
    )


def _pick_tile(n, quantum, max_tile):
    """Largest tile <= max_tile that divides n and is a multiple of `quantum`;
    falls back to the full extent (always a legal BlockSpec block)."""
    if n <= max_tile:
        return n
    t = max_tile - (max_tile % quantum)
    while t >= quantum:
        if n % t == 0:
            return t
        t -= quantum
    return n


def _im2col(x, patch_size, stride):
    """(B, C, H, W) -> (B, out_h, out_w, C*P*P), K ordered (c, ky, kx) so it
    matches PyTorch Conv2d weight.reshape(embed_dim, -1)."""
    B, C, H, W = x.shape
    P, s = patch_size, stride
    out_h = (H - P) // s + 1
    out_w = (W - P) // s + 1
    if P == s and H % P == 0 and W % P == 0:
        # Non-overlapping patches (the PatchEmbed default): pure reshape/transpose.
        p = x.reshape(B, C, out_h, P, out_w, P)
        p = p.transpose(0, 2, 4, 1, 3, 5)                 # (B, oh, ow, C, P, P)
        return p.reshape(B, out_h, out_w, C * P * P)
    # General stride: strided slices per tap (still pure layout, no compute).
    taps = []
    for ky in range(P):
        for kx in range(P):
            taps.append(x[:, :, ky:ky + s * out_h:s, kx:kx + s * out_w:s])
    p = jnp.stack(taps, axis=2)                           # (B, C, P*P, oh, ow)
    p = p.transpose(0, 3, 4, 1, 2)                        # (B, oh, ow, C, P*P)
    return p.reshape(B, out_h, out_w, C * P * P)


def patch_embed(x, w, b, patch_size=4, stride=4):
    """x: (B, C, H, W); w: (embed_dim, C, P, P) (PyTorch OIHW); b: (embed_dim,)
    Returns (B, num_patches, embed_dim) == PyTorch PatchEmbed.forward(x)."""
    B, C, H, W = x.shape
    embed_dim = w.shape[0]
    P = patch_size
    patches = _im2col(x, P, stride)                        # (B, oh, ow, K)
    out_h, out_w = patches.shape[1], patches.shape[2]
    K = C * P * P
    M = B * out_h * out_w

    xm = patches.reshape(M, K)
    wm = jnp.transpose(w.reshape(embed_dim, K))            # (K, embed_dim), K = (c, ky, kx)
    bm = b.reshape(1, embed_dim)

    tile_m = _pick_tile(M, 8, 512)                         # sublane-aligned rows
    tile_n = _pick_tile(embed_dim, 128, 512)               # lane-dense output columns

    out = pl.pallas_call(
        _patch_matmul_kernel,
        out_shape=jax.ShapeDtypeStruct((M, embed_dim), jnp.float32),
        grid=(M // tile_m, embed_dim // tile_n),
        in_specs=[
            pl.BlockSpec((tile_m, K), lambda i, j: (i, 0)),
            pl.BlockSpec((K, tile_n), lambda i, j: (0, j)),
            pl.BlockSpec((1, tile_n), lambda i, j: (0, j)),
        ],
        out_specs=pl.BlockSpec((tile_m, tile_n), lambda i, j: (i, j)),
        compiler_params=pltpu.CompilerParams(
            dimension_semantics=("parallel", "parallel")),
    )(xm, wm, bm)

    return out.reshape(B, out_h * out_w, embed_dim)


# --------------------------------------------------------------------------
# Pure-JAX reference (XLA conv, no Pallas) for the correctness check
# --------------------------------------------------------------------------
def reference_patch_embed(x, w, b, stride):
    y = jax.lax.conv_general_dilated(
        x, w, window_strides=(stride, stride), padding="VALID",
        dimension_numbers=("NCHW", "OIHW", "NCHW"))
    y = y + b[None, :, None, None]
    B, O, Hp, Wp = y.shape
    return y.reshape(B, O, Hp * Wp).transpose(0, 2, 1)     # flatten(2).transpose(1, 2)


if __name__ == "__main__":
    # Small shapes consistent with the module (patch_size = stride = 4).
    B, in_chans, H, W = 2, 4, 16, 16
    patch_size = stride = 4
    embed_dim = 128

    key = jax.random.PRNGKey(0)
    kx, kw, kb = jax.random.split(key, 3)
    x = jax.random.normal(kx, (B, in_chans, H, W), jnp.float32)
    fan_in = in_chans * patch_size * patch_size
    w = jax.random.normal(kw, (embed_dim, in_chans, patch_size, patch_size),
                          jnp.float32) / jnp.sqrt(float(fan_in))
    b = jax.random.normal(kb, (embed_dim,), jnp.float32) * 0.02

    out = jax.block_until_ready(patch_embed(x, w, b, patch_size, stride))
    n_patches = (H // patch_size) * (W // patch_size)
    assert out.shape == (B, n_patches, embed_dim) and out.dtype == jnp.float32

    ref = jax.block_until_ready(reference_patch_embed(x, w, b, stride))
    err = float(jnp.max(jnp.abs(out - ref)))
    assert err < 1e-3, f"mismatch vs reference: {err}"

    print("KERNEL_OK")
</pallas_src>

<mosaic_0001>
module attributes {stable_mosaic.version = 11 : i64} {
  func.func @_patch_matmul_kernel(%arg0: i32, %arg1: i32, %arg2: memref<32x64xf32, #tpu.memory_space<vmem>>, %arg3: memref<64x128xf32, #tpu.memory_space<vmem>>, %arg4: memref<1x128xf32, #tpu.memory_space<vmem>>, %arg5: memref<32x128xf32, #tpu.memory_space<vmem>>) attributes {dimension_semantics = [#tpu.dimension_semantics<parallel>, #tpu.dimension_semantics<parallel>], iteration_bounds = array<i64: 1, 1>, scalar_prefetch = 0 : i64, scratch_operands = 0 : i64, tpu.core_type = #tpu.core_type<tc>, window_params = [{transform_indices = @transform_0, window_bounds = array<i64: 32, 64>}, {transform_indices = @transform_1, window_bounds = array<i64: 64, 128>}, {transform_indices = @transform_2, window_bounds = array<i64: 1, 128>}, {transform_indices = @transform_3, window_bounds = array<i64: 32, 128>}]} {
    %c0 = arith.constant 0 : index
    %c0_0 = arith.constant 0 : index
    %0 = vector.load %arg2[%c0, %c0_0] : memref<32x64xf32, #tpu.memory_space<vmem>>, vector<32x64xf32>
    %c0_1 = arith.constant 0 : index
    %c0_2 = arith.constant 0 : index
    %1 = vector.load %arg3[%c0_1, %c0_2] : memref<64x128xf32, #tpu.memory_space<vmem>>, vector<64x128xf32>
    %cst = arith.constant dense<0.000000e+00> : vector<32x128xf32>
    %2 = tpu.matmul %0, %1, %cst {dimension_numbers = #tpu.dot_dimension_numbers<[1], [0], [0], [1], [0, 0, 1, 1], [], []>} : vector<32x64xf32>, vector<64x128xf32>, vector<32x128xf32> -> vector<32x128xf32>
    %c0_3 = arith.constant 0 : index
    %c0_4 = arith.constant 0 : index
    %3 = vector.load %arg4[%c0_3, %c0_4] : memref<1x128xf32, #tpu.memory_space<vmem>>, vector<1x128xf32>
    %4 = vector.broadcast %3 : vector<1x128xf32> to vector<32x128xf32>
    %5 = arith.addf %2, %4 : vector<32x128xf32>
    %c0_5 = arith.constant 0 : index
    %c0_6 = arith.constant 0 : index
    %6 = vector.load %arg5[%c0_5, %c0_6] : memref<32x128xf32, #tpu.memory_space<vmem>>, vector<32x128xf32>
    tpu.vector_store %arg5[%c0_5, %c0_6], %5 {strides = array<i32>} : memref<32x128xf32, #tpu.memory_space<vmem>>, vector<32x128xf32>,
    return
  }
  func.func @transform_0(%arg0: i32, %arg1: i32) -> (i32, i32) {
    %c0_i32 = arith.constant 0 : i32
    %c0_i32_0 = arith.constant 0 : i32
    return %arg0, %c0_i32 : i32, i32
  }
  func.func @transform_1(%arg0: i32, %arg1: i32) -> (i32, i32) {
    %c0_i32 = arith.constant 0 : i32
    %c0_i32_0 = arith.constant 0 : i32
    return %c0_i32, %arg1 : i32, i32
  }
  func.func @transform_2(%arg0: i32, %arg1: i32) -> (i32, i32) {
    %c0_i32 = arith.constant 0 : i32
    %c0_i32_0 = arith.constant 0 : i32
    return %c0_i32, %arg1 : i32, i32
  }
  func.func @transform_3(%arg0: i32, %arg1: i32) -> (i32, i32) {
    %c0_i32 = arith.constant 0 : i32
    return %arg0, %arg1 : i32, i32
  }
}

</mosaic_0001>

<llo_original>
// kernel: tpu_custom_call.1
$region0: #{tpu_custom_call.1}
  #allocation0 [shape = 'u32[]', space=smem, size = 0x4, offset = 0x4, fixed_abs, tag = 'smem constant byte address 0x4 - core index']
  #allocation1 [shape = 'u32[144,128]{1,0:T(1,128)}', space=vmem, size = 0x12000, scoped, tag = 'internal scratch']
  %s0 = inlined_call_operand.hbm [shape: f32[32,64], index: 0, kind: input, shape index: {}]
  %s1 = inlined_call_operand.hbm [shape: f32[64,128], index: 1, kind: input, shape index: {}]
  %s2 = inlined_call_operand.vmem [shape: f32[1,128], index: 2, kind: input, shape index: {}]
  %s3 = inlined_call_operand.hbm [shape: f32[32,128], index: 3, kind: output, shape index: {}]
  %s4 = sld [smem:[#allocation0]]
  $region30: #{tpu_custom_call.1} parent=0
    _
  %s6 = ssub.s32 1, %s4
  %s7 = scalar_select 0, %s6, %s4
  $region1: #{tpu_custom_call.1} parent=0
    #allocation2 [shape = 'u8[16384]{0}', space=vmem, size = 0x4000, scoped, tag = 'input window, operand 0, single buffered']
    #allocation3 [shape = 's32[1]{0}', space=sflag, size = 0x4, scoped, tag = 'scoped memory for tpu_custom_call.1']
    #allocation4 [shape = 's32[1]{0}', space=sflag, size = 0x4, scoped, tag = 'scoped memory for tpu_custom_call.1']
    #allocation5 [shape = 'u8[32768]{0}', space=vmem, size = 0x8000, scoped, tag = 'input window, operand 1, single buffered']
    #allocation6 [shape = 's32[1]{0}', space=sflag, size = 0x4, scoped, tag = 'scoped memory for tpu_custom_call.1']
    #allocation7 [shape = 'u8[16384]{0}', space=vmem, size = 0x4000, scoped, tag = 'output window, operand 0, single buffered']
    %8 = vsyncpa [#allocation3], 0
    %9 = vsyncpa [#allocation6], 0
    %10 = vsyncpa [#allocation4], 0
    // Predicated region
    $region2: #{tpu_custom_call.1} parent=1 // pred_check
      _
    $region3: #{tpu_custom_call.1} parent=1 // pred_check_branch
      %12 = sbr.rel (0) target = $region5
    $region4: #{tpu_custom_call.1} parent=1 // pred_region
      %s14 = ssub.s32 512, 512
      %15 = vsyncadd [#allocation3], %s14
      %s16 = sshll.u32 [#allocation2], 4
      %s17 = int_to_ptr.vmem [resolvable:$true] %s16
      %22 = dma.hbm_to_vmem [thread:$0]  %s0, 512, %s17, [#allocation3], 128, 128, 8
    $region5: #{tpu_custom_call.1} parent=1 // pred_fallthru
      _
    // Predicated region
    $region6: #{tpu_custom_call.1} parent=1 // pred_check
      _
    $region7: #{tpu_custom_call.1} parent=1 // pred_check_branch
      %24 = sbr.rel (0) target = $region9
    $region8: #{tpu_custom_call.1} parent=1 // pred_region
      %s26 = ssub.s32 1024, 1024
      %27 = vsyncadd [#allocation6], %s26
      %s28 = sshll.u32 [#allocation5], 4
      %s29 = int_to_ptr.vmem [resolvable:$true] %s28
      %34 = dma.hbm_to_vmem [thread:$0]  %s1, 1024, %s29, [#allocation6], 128, 128, 8
    $region9: #{tpu_custom_call.1} parent=1 // pred_fallthru
      _
    // Predicated region
    $region10: #{tpu_custom_call.1} parent=1 // pred_check
      _
    $region11: #{tpu_custom_call.1} parent=1 // pred_check_branch
      %36 = sbr.rel (0) target = $region13
    $region12: #{tpu_custom_call.1} parent=1 // pred_region
      _
    $region13: #{tpu_custom_call.1} parent=1 // pred_fallthru
      _
    // Predicated region
    $region14: #{tpu_custom_call.1} parent=1 // pred_check
      _
    $region15: #{tpu_custom_call.1} parent=1 // pred_check_branch
      %38 = sbr.rel (0) target = $region17
    $region16: #{tpu_custom_call.1} parent=1 // pred_region
      %39 = dma.done [#allocation3], 512
    $region17: #{tpu_custom_call.1} parent=1 // pred_fallthru
      _
    // Predicated region
    $region18: #{tpu_custom_call.1} parent=1 // pred_check
      _
    $region19: #{tpu_custom_call.1} parent=1 // pred_check_branch
      %41 = sbr.rel (0) target = $region21
    $region20: #{tpu_custom_call.1} parent=1 // pred_region
      %42 = dma.done [#allocation6], 1024
    $region21: #{tpu_custom_call.1} parent=1 // pred_fallthru
      _
    %v43 = vld [vmem:[#allocation2] sm:$0xff]
    %v44 = vld [vmem:[#allocation2 + $0x8] sm:$0xff]
    %v45 = vld [vmem:[#allocation2 + $0x10] sm:$0xff]
    %v46 = vld [vmem:[#allocation2 + $0x18] sm:$0xff]
    %v47 = vld [vmem:[#allocation5] sm:$0xff]
    %v48 = vld [vmem:[#allocation5 + $0x8] sm:$0xff]
    %v49 = vld [vmem:[#allocation5 + $0x10] sm:$0xff]
    %v50 = vld [vmem:[#allocation5 + $0x18] sm:$0xff]
    %v51 = vld [vmem:[#allocation5 + $0x20] sm:$0xff]
    %v52 = vld [vmem:[#allocation5 + $0x28] sm:$0xff]
    %v53 = vld [vmem:[#allocation5 + $0x30] sm:$0xff]
    %v54 = vld [vmem:[#allocation5 + $0x38] sm:$0xff]
    %v55 = vld [vmem:[%s2] sm:$0x1]
    %v57 = vlaneseq
    %v58 = vshrl.u32 %v57, 7
    %v59 = vsub.s32 0, %v58
    %v60 = vrot.slane %v55, %v59
    %vm62 = vcmask 523264
    %v64 = vsel %vm62, %v43, 0
    %v67 = vsel %vm62, %v44, 0
    %v70 = vsel %vm62, %v45, 0
    %v73 = vsel %vm62, %v46, 0
    %75 = vmatprep.subr.mxu0 0.0
    %76 = vmatpush1.msra.mxu0 %v47
    %77 = vmatprep.subr.mxu0 0.0
    %78 = vmatpush1.msra.mxu0 %v48
    %79 = vmatprep.subr.mxu0 0.0
    %80 = vmatpush1.msra.mxu0 %v49
    %81 = vmatprep.subr.mxu0 0.0
    %82 = vmatpush1.msra.mxu0 %v50
    %83 = vmatprep.subr.mxu0 0.0
    %84 = vmatpush1.msra.mxu0 %v51
    %85 = vmatprep.subr.mxu0 0.0
    %86 = vmatpush1.msra.mxu0 %v52
    %87 = vmatprep.subr.mxu0 0.0
    %88 = vmatpush1.msra.mxu0 %v53
    %89 = vmatprep.subr.mxu0 0.0
    %90 = vmatpush1.msra.mxu0 %v54
    %91 = vmatprep.subr.mxu0 0.0
    %92 = vmatpush1.msra.mxu0 0.0
    %93 = vmatprep.subr.mxu0 0.0
    %94 = vmatpush1.msra.mxu0 0.0
    %95 = vmatprep.subr.mxu0 0.0
    %96 = vmatpush1.msra.mxu0 0.0
    %97 = vmatprep.subr.mxu0 0.0
    %98 = vmatpush1.msra.mxu0 0.0
    %99 = vmatprep.subr.mxu0 0.0
    %100 = vmatpush1.msra.mxu0 0.0
    %101 = vmatprep.subr.mxu0 0.0
    %102 = vmatpush1.msra.mxu0 0.0
    %103 = vmatprep.subr.mxu0 0.0
    %104 = vmatpush1.msra.mxu0 0.0
    %105 = vmatprep.subr.mxu0 0.0
    %106 = vmatpush1.msra.mxu0 0.0
    %107 = vmatprep.subr.mxu0 0.0
    %108 = vmatpush1.msra.mxu0 0.0
    %109 = vmatprep.subr.mxu0 0.0
    %110 = vmatpush1.msra.mxu0 0.0
    %111 = vmatprep.subr.mxu0 0.0
    %112 = vmatpush1.msra.mxu0 0.0
    %113 = vmatprep.subr.mxu0 0.0
    %114 = vmatpush1.msra.mxu0 0.0
    %115 = vmatprep.subr.mxu0 0.0
    %116 = vmatpush1.msra.mxu0 0.0
    %117 = vmatprep.subr.mxu0 0.0
    %118 = vmatpush1.msra.mxu0 0.0
    %119 = vmatprep.subr.mxu0 0.0
    %120 = vmatpush1.msra.mxu0 0.0
    %121 = vmatprep.subr.mxu0 0.0
    %122 = vmatpush1.msra.mxu0 0.0
    %123 = vmatprep.subr.mxu0 0.0
    %124 = vmatpush1.msra.mxu0 0.0
    %125 = vmatprep.subr.mxu0 0.0
    %126 = vmatpush1.msra.mxu0 0.0
    %127 = vmatprep.subr.mxu0 0.0
    %128 = vmatpush1.msra.mxu0 0.0
    %129 = vmatprep.subr.mxu0 0.0
    %130 = vmatpush1.msra.mxu0 0.0
    %131 = vmatprep.subr.mxu0 0.0
    %132 = vmatpush1.msra.mxu0 0.0
    %133 = vmatprep.subr.mxu0 0.0
    %134 = vmatpush1.msra.mxu0 0.0
    %135 = vmatprep.subr.mxu0 0.0
    %136 = vmatpush1.msra.mxu0 0.0
    %137 = vmatprep.subr.mxu0 0.0
    %138 = vmatpush1.msra.mxu0 0.0
    %139 = vmatprep.mubr.f32.mxu0 0.0
    %140 = vmatmul.mubr.f32.gmra.mrb[0].mxu0 %v64
    %v141 = vpop.f32.mrb[0].mxu0
    %v142 = vadd.f32 %v60, %v141
    %v143 = vpop.f32.mrb[0].mxu0
    %144 = vmatprep.mubr.f32.mxu0 0.0
    %145 = vmatmul.mubr.f32.gmra.mrb[0].mxu0 %v67
    %v146 = vpop.f32.mrb[0].mxu0
    %v147 = vadd.f32 %v60, %v146
    %v148 = vpop.f32.mrb[0].mxu0
    %149 = vmatprep.mubr.f32.mxu0 0.0
    %150 = vmatmul.mubr.f32.gmra.mrb[0].mxu0 %v70
    %v151 = vpop.f32.mrb[0].mxu0
    %v152 = vadd.f32 %v60, %v151
    %v153 = vpop.f32.mrb[0].mxu0
    %154 = vmatprep.mubr.f32.mxu0 0.0
    %155 = vmatmul.mubr.f32.gmra.mrb[0].mxu0 %v73
    %v156 = vpop.f32.mrb[0].mxu0
    %v157 = vadd.f32 %v60, %v156
    %v158 = vpop.f32.mrb[0].mxu0
    %159 = vdwg.mxu0
    %160 = vst [vmem:[#allocation7] sm:$0xff] %v142
    %161 = vst [vmem:[#allocation7 + $0x8] sm:$0xff] %v147
    %162 = vst [vmem:[#allocation7 + $0x10] sm:$0xff] %v152
    %163 = vst [vmem:[#allocation7 + $0x18] sm:$0xff] %v157
    // Predicated region
    $region22: #{tpu_custom_call.1} parent=1 // pred_check
      _
    $region23: #{tpu_custom_call.1} parent=1 // pred_check_branch
      %165 = sbr.rel (0) target = $region25
    $region24: #{tpu_custom_call.1} parent=1 // pred_region
      %s167 = ssub.s32 512, 512
      %168 = vsyncadd [#allocation4], %s167
      %s169 = sshll.u32 [#allocation7], 4
      %s170 = int_to_ptr.vmem [resolvable:$true] %s169
      %175 = dma.vmem_to_hbm [thread:$0]  %s170, 512, %s3, [#allocation4], 128, 128, 8
    $region25: #{tpu_custom_call.1} parent=1 // pred_fallthru
      _
    // Predicated region
    $region26: #{tpu_custom_call.1} parent=1 // pred_check
      _
    $region27: #{tpu_custom_call.1} parent=1 // pred_check_branch
      %177 = sbr.rel (0) target = $region29
    $region28: #{tpu_custom_call.1} parent=1 // pred_region
      %178 = dma.done [#allocation4], 512
    $region29: #{tpu_custom_call.1} parent=1 // pred_fallthru
      _
    %179 = vsyncpa [#allocation3], 1
    %180 = vsyncpa [#allocation6], 1
    %181 = vsyncpa [#allocation4], 1

</llo_original>
